<compile_context>
chip_gen: v5e
topology: v5e:2x2
jax: 0.10.0
libtpu: 0.0.40
codegen_flags: <defaults>
</compile_context>

<pallas_src>
from functools import partial

import jax
import jax.numpy as jnp
from jax import lax
from jax.experimental import pallas as pl
from jax.experimental.pallas import tpu as pltpu


def _mlp_block_kernel(x_ref, w1f_ref, ap_ref, an_ref, bias_ref, w2_ref, o_ref,
                      *, seq_len, dim_conv3, matmul_dtype):
    """One row tile (Bt whole samples flattened to R = Bt*seq_len rows) per step.

    x_ref   : (R, C)  f32 input rows, channels-last
    w1f_ref : (C, H)  expand weights, BN scale + center conv tap folded in
    ap_ref  : (dc, H) "previous" conv tap folded through (w1 * bn_scale)[:dc]
    an_ref  : (dc, H) "next"     conv tap folded through (w1 * bn_scale)[:dc]
    bias_ref: (1, H)  folded BatchNorm bias
    w2_ref  : (H, C)  project weights
    o_ref   : (R, C)  output rows
    """
    x = x_ref[...]                                     # (R, C) f32
    R = x.shape[0]
    dc = dim_conv3

    # ---- k=3 halo rows for the first dc channels (sublane roll + boundary mask)
    x_dc = x[:, :dc]                                   # (R, dc)
    pos = lax.broadcasted_iota(jnp.int32, (R, 1), 0) % seq_len
    zeros = jnp.zeros_like(x_dc)
    # np.roll semantics: roll(x, 1)[i] = x[i-1]; roll(x, R-1)[i] = x[i+1]
    x_prev = jnp.where(pos == 0, zeros, pltpu.roll(x_dc, 1, 0))
    x_next = jnp.where(pos == seq_len - 1, zeros, pltpu.roll(x_dc, R - 1, 0))

    xm = x.astype(matmul_dtype)
    # ---- expand matmul with the partial-conv taps fused in (f32 accumulation)
    h = (jnp.dot(xm, w1f_ref[...], preferred_element_type=jnp.float32)
         + jnp.dot(x_prev.astype(matmul_dtype), ap_ref[...],
                   preferred_element_type=jnp.float32)
         + jnp.dot(x_next.astype(matmul_dtype), an_ref[...],
                   preferred_element_type=jnp.float32))
    h = jnp.maximum(h + bias_ref[...], 0.0)            # BN bias + ReLU, f32

    # ---- project + residual (drop_path = Identity, layer_scale disabled)
    # TODO(synk): stochastic DropPath (p>0) and the layer_scale path are not
    # exercised by this configuration.
    y = jnp.dot(h.astype(matmul_dtype), w2_ref[...],
                preferred_element_type=jnp.float32)    # (R, C) f32
    o_ref[...] = (y + x).astype(o_ref.dtype)


def _pick_block_batch(batch, seq_len, target_rows=256):
    """Largest Bt <= ceil(target_rows/L) dividing batch with (Bt*L) % 8 == 0."""
    want = min(batch, max(1, -(-target_rows // seq_len)))
    for bt in range(want, 0, -1):
        if batch % bt == 0 and (bt * seq_len) % 8 == 0:
            return bt
    return batch   # single full-extent block is always a legal BlockSpec


def mlp_block_pallas_nlc(x_nlc, w_pc_torch, w1_torch, w2_torch,
                         bn_gamma, bn_beta, bn_mean, bn_var, *,
                         n_div, eps=1e-5, matmul_dtype=jnp.float32,
                         block_batch=None):
    """Channels-last entry point.  x_nlc: (B, L, C) float32.  Returns (B, L, C)."""
    B, L, C = x_nlc.shape
    dc = C // n_div
    H = w1_torch.shape[0]

    # ---- parameter folding (plain JAX glue; runs once, not per token) ----
    bn_scale = bn_gamma / jnp.sqrt(bn_var + eps)                          # (H,)
    bn_bias = (bn_beta - bn_mean * bn_scale).reshape(1, H).astype(jnp.float32)
    w1s = jnp.transpose(w1_torch[:, :, 0], (1, 0)) * bn_scale[None, :]    # (C, H)
    wpc = jnp.transpose(w_pc_torch, (2, 1, 0))                            # (3, dc, dc) [tap, in, out]
    a_prev = wpc[0] @ w1s[:dc, :]                                         # (dc, H)
    a_cent = wpc[1] @ w1s[:dc, :]                                         # (dc, H)
    a_next = wpc[2] @ w1s[:dc, :]                                         # (dc, H)
    w1_fused = jnp.concatenate([a_cent, w1s[dc:, :]], axis=0)             # (C, H)
    w2 = jnp.transpose(w2_torch[:, :, 0], (1, 0))                         # (H, C)

    w1_fused = w1_fused.astype(matmul_dtype)
    a_prev = a_prev.astype(matmul_dtype)
    a_next = a_next.astype(matmul_dtype)
    w2 = w2.astype(matmul_dtype)

    if block_batch is None:
        block_batch = _pick_block_batch(B, L)
    bt = block_batch
    assert B % bt == 0, "block_batch must divide the batch size"
    rt = bt * L

    x_flat = x_nlc.reshape(B * L, C)   # contiguous merge, no data movement

    out_flat = pl.pallas_call(
        partial(_mlp_block_kernel, seq_len=L, dim_conv3=dc,
                matmul_dtype=matmul_dtype),
        out_shape=jax.ShapeDtypeStruct((B * L, C), x_nlc.dtype),
        grid=(B // bt,),
        in_specs=[
            pl.BlockSpec((rt, C), lambda i: (i, 0)),    # activations (row tile)
            pl.BlockSpec((C, H), lambda i: (0, 0)),     # fused expand weights
            pl.BlockSpec((dc, H), lambda i: (0, 0)),    # prev-tap weights
            pl.BlockSpec((dc, H), lambda i: (0, 0)),    # next-tap weights
            pl.BlockSpec((1, H), lambda i: (0, 0)),     # folded BN bias
            pl.BlockSpec((H, C), lambda i: (0, 0)),     # project weights
        ],
        out_specs=pl.BlockSpec((rt, C), lambda i: (i, 0)),
        compiler_params=pltpu.CompilerParams(
            dimension_semantics=("parallel",)),
    )(x_flat, w1_fused, a_prev, a_next, bn_bias, w2)

    return out_flat.reshape(B, L, C)


def mlp_block_pallas_ncl(x_ncl, *args, **kwargs):
    """PyTorch-layout adapter: (B, C, L) in / out.  The transposes here are
    glue only; keep activations channels-last across the network to avoid them."""
    out_nlc = mlp_block_pallas_nlc(jnp.transpose(x_ncl, (0, 2, 1)), *args, **kwargs)
    return jnp.transpose(out_nlc, (0, 2, 1))


def mlp_block_reference(x_ncl, w_pc_torch, w1_torch, w2_torch,
                        bn_gamma, bn_beta, bn_mean, bn_var, *,
                        n_div, eps=1e-5):
    """Pure-JAX reference following the PyTorch module exactly (NCL layout)."""
    B, C, L = x_ncl.shape
    dc = C // n_div
    x1 = x_ncl[:, :dc, :]
    y1 = lax.conv_general_dilated(
        x1, w_pc_torch, window_strides=(1,), padding=[(1, 1)],
        dimension_numbers=("NCH", "OIH", "NCH"))
    x_sm = jnp.concatenate([y1, x_ncl[:, dc:, :]], axis=1)
    h = jnp.einsum("hc,bcl->bhl", w1_torch[:, :, 0], x_sm)
    h = (h - bn_mean[None, :, None]) / jnp.sqrt(bn_var + eps)[None, :, None]
    h = h * bn_gamma[None, :, None] + bn_beta[None, :, None]
    h = jnp.maximum(h, 0.0)
    y = jnp.einsum("ch,bhl->bcl", w2_torch[:, :, 0], h)
    return y + x_ncl


if __name__ == "__main__":
    # Small shapes consistent with the module: Conv1d operates on (B, dim, L).
    B, dim, L = 4, 32, 16
    n_div = 4
    mlp_ratio = 2.0
    hidden = int(dim * mlp_ratio)
    dc = dim // n_div

    key = jax.random.PRNGKey(0)
    kx, kpc, kw1, kw2, kg, kb, km, kv = jax.random.split(key, 8)

    x = jax.random.normal(kx, (B, dim, L), dtype=jnp.float32)              # NCL like PyTorch
    w_pc = 0.1 * jax.random.normal(kpc, (dc, dc, 3), dtype=jnp.float32)     # Conv1d(dc,dc,3)
    w1 = 0.1 * jax.random.normal(kw1, (hidden, dim, 1), dtype=jnp.float32)  # Conv1d(dim,hid,1)
    w2 = 0.1 * jax.random.normal(kw2, (dim, hidden, 1), dtype=jnp.float32)  # Conv1d(hid,dim,1)
    bn_gamma = 1.0 + 0.1 * jax.random.normal(kg, (hidden,), dtype=jnp.float32)
    bn_beta = 0.1 * jax.random.normal(kb, (hidden,), dtype=jnp.float32)
    bn_mean = 0.1 * jax.random.normal(km, (hidden,), dtype=jnp.float32)
    bn_var = jnp.abs(jax.random.normal(kv, (hidden,), dtype=jnp.float32)) + 0.5

    ref_ncl = mlp_block_reference(x, w_pc, w1, w2, bn_gamma, bn_beta, bn_mean,
                                  bn_var, n_div=n_div)
    ref_nlc = jnp.transpose(jax.block_until_ready(ref_ncl), (0, 2, 1))

    x_nlc = jnp.transpose(x, (0, 2, 1))                                     # channels-last

    # f32 path: exact-semantics check, 2 samples per grid step -> grid=(2,)
    out_f32 = mlp_block_pallas_nlc(x_nlc, w_pc, w1, w2, bn_gamma, bn_beta,
                                   bn_mean, bn_var, n_div=n_div,
                                   matmul_dtype=jnp.float32, block_batch=2)
    out_f32 = jax.block_until_ready(out_f32)
    assert out_f32.shape == (B, L, dim)
    err_f32 = jnp.max(jnp.abs(out_f32 - ref_nlc))
    assert jnp.allclose(out_f32, ref_nlc, rtol=2e-4, atol=2e-4), (
        f"f32 max abs err {err_f32}")

    # bf16-matmul path (recommended on v6e/v7x): f32 accumulation + f32 elementwise
    out_bf16 = mlp_block_pallas_nlc(x_nlc, w_pc, w1, w2, bn_gamma, bn_beta,
                                    bn_mean, bn_var, n_div=n_div,
                                    matmul_dtype=jnp.bfloat16)
    out_bf16 = jax.block_until_ready(out_bf16)
    err_bf16 = jnp.max(jnp.abs(out_bf16 - ref_nlc))
    assert jnp.allclose(out_bf16, ref_nlc, rtol=3e-2, atol=3e-2), (
        f"bf16 max abs err {err_bf16}")

    print("KERNEL_OK")
</pallas_src>

<mosaic_0001>
module attributes {stable_mosaic.version = 11 : i64} {
  func.func @_mlp_block_kernel(%arg0: i32, %arg1: memref<32x32xf32, #tpu.memory_space<vmem>>, %arg2: memref<32x64xf32, #tpu.memory_space<vmem>>, %arg3: memref<8x64xf32, #tpu.memory_space<vmem>>, %arg4: memref<8x64xf32, #tpu.memory_space<vmem>>, %arg5: memref<1x64xf32, #tpu.memory_space<vmem>>, %arg6: memref<64x32xf32, #tpu.memory_space<vmem>>, %arg7: memref<32x32xf32, #tpu.memory_space<vmem>>) attributes {dimension_semantics = [#tpu.dimension_semantics<parallel>], iteration_bounds = array<i64: 2>, scalar_prefetch = 0 : i64, scratch_operands = 0 : i64, tpu.core_type = #tpu.core_type<tc>, window_params = [{transform_indices = @transform_0, window_bounds = array<i64: 32, 32>}, {pipeline_mode = #tpu.pipeline_mode<synchronous>, transform_indices = @transform_1, window_bounds = array<i64: 32, 64>}, {pipeline_mode = #tpu.pipeline_mode<synchronous>, transform_indices = @transform_2, window_bounds = array<i64: 8, 64>}, {pipeline_mode = #tpu.pipeline_mode<synchronous>, transform_indices = @transform_3, window_bounds = array<i64: 8, 64>}, {pipeline_mode = #tpu.pipeline_mode<synchronous>, transform_indices = @transform_4, window_bounds = array<i64: 1, 64>}, {pipeline_mode = #tpu.pipeline_mode<synchronous>, transform_indices = @transform_5, window_bounds = array<i64: 64, 32>}, {transform_indices = @transform_6, window_bounds = array<i64: 32, 32>}]} {
    %c0 = arith.constant 0 : index
    %c0_0 = arith.constant 0 : index
    %0 = vector.load %arg1[%c0, %c0_0] : memref<32x32xf32, #tpu.memory_space<vmem>>, vector<32x32xf32>
    %1 = vector.extract_strided_slice %0 {offsets = [0, 0], sizes = [32, 8], strides = [1, 1]} : vector<32x32xf32> to vector<32x8xf32>
    %2 = tpu.iota {dimensions = array<i32: 0>} : vector<32x1xi32>
    %c16_i32 = arith.constant 16 : i32
    %c0_i32 = arith.constant 0 : i32
    %3 = arith.cmpi eq, %c16_i32, %c0_i32 : i32
    %c1_i32 = arith.constant 1 : i32
    %4 = arith.select %3, %c1_i32, %c16_i32 : i32
    %5 = vector.broadcast %4 : i32 to vector<32x1xi32>
    %6 = arith.remsi %2, %5 : vector<32x1xi32>
    %c0_i32_1 = arith.constant 0 : i32
    %7 = vector.broadcast %c0_i32_1 : i32 to vector<32x1xi32>
    %8 = arith.cmpi ne, %6, %7 : vector<32x1xi32>
    %c0_i32_2 = arith.constant 0 : i32
    %9 = vector.broadcast %c0_i32_2 : i32 to vector<32x1xi32>
    %10 = arith.cmpi slt, %6, %9 : vector<32x1xi32>
    %c0_i32_3 = arith.constant 0 : i32
    %11 = arith.cmpi slt, %4, %c0_i32_3 : i32
    %12 = vector.broadcast %11 : i1 to vector<32x1xi1>
    %13 = vector.broadcast %12 : vector<32x1xi1> to vector<32x1xi1>
    %14 = arith.xori %10, %13 : vector<32x1xi1>
    %15 = arith.andi %14, %8 : vector<32x1xi1>
    %16 = vector.broadcast %4 : i32 to vector<32x1xi32>
    %17 = arith.addi %6, %16 : vector<32x1xi32>
    %18 = arith.select %15, %17, %6 : vector<32x1xi1>, vector<32x1xi32>
    %cst = arith.constant 0.000000e+00 : f32
    %19 = vector.broadcast %cst : f32 to vector<32x8xf32>
    %c0_i32_4 = arith.constant 0 : i32
    %20 = vector.broadcast %c0_i32_4 : i32 to vector<32x1xi32>
    %21 = arith.cmpi eq, %18, %20 : vector<32x1xi32>
    %c1_i32_5 = arith.constant 1 : i32
    %22 = tpu.dynamic_rotate %1 by %c1_i32_5 dim 0 : vector<32x8xf32>, i32 -> vector<32x8xf32>
    %23 = vector.shape_cast %21 : vector<32x1xi1> to vector<32x1xi1>
    %24 = vector.broadcast %23 : vector<32x1xi1> to vector<32x8xi1>
    %25 = arith.select %24, %19, %22 : vector<32x8xi1>, vector<32x8xf32>
    %c15_i32 = arith.constant 15 : i32
    %26 = vector.broadcast %c15_i32 : i32 to vector<32x1xi32>
    %27 = arith.cmpi eq, %18, %26 : vector<32x1xi32>
    %c31_i32 = arith.constant 31 : i32
    %28 = tpu.dynamic_rotate %1 by %c31_i32 dim 0 : vector<32x8xf32>, i32 -> vector<32x8xf32>
    %29 = vector.shape_cast %27 : vector<32x1xi1> to vector<32x1xi1>
    %30 = vector.broadcast %29 : vector<32x1xi1> to vector<32x8xi1>
    %31 = arith.select %30, %19, %28 : vector<32x8xi1>, vector<32x8xf32>
    %c0_6 = arith.constant 0 : index
    %c0_7 = arith.constant 0 : index
    %32 = vector.load %arg2[%c0_6, %c0_7] : memref<32x64xf32, #tpu.memory_space<vmem>>, vector<32x64xf32>
    %cst_8 = arith.constant dense<0.000000e+00> : vector<32x64xf32>
    %33 = tpu.matmul %0, %32, %cst_8 {dimension_numbers = #tpu.dot_dimension_numbers<[1], [0], [0], [1], [0, 0, 1, 1], [], []>} : vector<32x32xf32>, vector<32x64xf32>, vector<32x64xf32> -> vector<32x64xf32>
    %c0_9 = arith.constant 0 : index
    %c0_10 = arith.constant 0 : index
    %34 = vector.load %arg3[%c0_9, %c0_10] : memref<8x64xf32, #tpu.memory_space<vmem>>, vector<8x64xf32>
    %cst_11 = arith.constant dense<0.000000e+00> : vector<32x64xf32>
    %35 = tpu.matmul %25, %34, %cst_11 {dimension_numbers = #tpu.dot_dimension_numbers<[1], [0], [0], [1], [0, 0, 1, 1], [], []>} : vector<32x8xf32>, vector<8x64xf32>, vector<32x64xf32> -> vector<32x64xf32>
    %36 = arith.addf %33, %35 : vector<32x64xf32>
    %c0_12 = arith.constant 0 : index
    %c0_13 = arith.constant 0 : index
    %37 = vector.load %arg4[%c0_12, %c0_13] : memref<8x64xf32, #tpu.memory_space<vmem>>, vector<8x64xf32>
    %cst_14 = arith.constant dense<0.000000e+00> : vector<32x64xf32>
    %38 = tpu.matmul %31, %37, %cst_14 {dimension_numbers = #tpu.dot_dimension_numbers<[1], [0], [0], [1], [0, 0, 1, 1], [], []>} : vector<32x8xf32>, vector<8x64xf32>, vector<32x64xf32> -> vector<32x64xf32>
    %39 = arith.addf %36, %38 : vector<32x64xf32>
    %c0_15 = arith.constant 0 : index
    %c0_16 = arith.constant 0 : index
    %40 = vector.load %arg5[%c0_15, %c0_16] : memref<1x64xf32, #tpu.memory_space<vmem>>, vector<1x64xf32>
    %41 = vector.broadcast %40 : vector<1x64xf32> to vector<32x64xf32>
    %42 = arith.addf %39, %41 : vector<32x64xf32>
    %cst_17 = arith.constant 0.000000e+00 : f32
    %43 = vector.broadcast %cst_17 : f32 to vector<32x64xf32>
    %44 = arith.maximumf %42, %43 : vector<32x64xf32>
    %c0_18 = arith.constant 0 : index
    %c0_19 = arith.constant 0 : index
    %45 = vector.load %arg6[%c0_18, %c0_19] : memref<64x32xf32, #tpu.memory_space<vmem>>, vector<64x32xf32>
    %cst_20 = arith.constant dense<0.000000e+00> : vector<32x32xf32>
    %46 = tpu.matmul %44, %45, %cst_20 {dimension_numbers = #tpu.dot_dimension_numbers<[1], [0], [0], [1], [0, 0, 1, 1], [], []>} : vector<32x64xf32>, vector<64x32xf32>, vector<32x32xf32> -> vector<32x32xf32>
    %47 = arith.addf %46, %0 : vector<32x32xf32>
    %c0_21 = arith.constant 0 : index
    %c0_22 = arith.constant 0 : index
    %48 = vector.load %arg7[%c0_21, %c0_22] : memref<32x32xf32, #tpu.memory_space<vmem>>, vector<32x32xf32>
    tpu.vector_store %arg7[%c0_21, %c0_22], %47 {strides = array<i32>} : memref<32x32xf32, #tpu.memory_space<vmem>>, vector<32x32xf32>,
    return
  }
  func.func @transform_0(%arg0: i32) -> (i32, i32) {
    %c0_i32 = arith.constant 0 : i32
    %c0_i32_0 = arith.constant 0 : i32
    return %arg0, %c0_i32 : i32, i32
  }
  func.func @transform_1(%arg0: i32) -> (i32, i32) {
    %c0_i32 = arith.constant 0 : i32
    %c0_i32_0 = arith.constant 0 : i32
    %c0_i32_1 = arith.constant 0 : i32
    return %c0_i32, %c0_i32_0 : i32, i32
  }
  func.func @transform_2(%arg0: i32) -> (i32, i32) {
    %c0_i32 = arith.constant 0 : i32
    %c0_i32_0 = arith.constant 0 : i32
    %c0_i32_1 = arith.constant 0 : i32
    return %c0_i32, %c0_i32_0 : i32, i32
  }
  func.func @transform_3(%arg0: i32) -> (i32, i32) {
    %c0_i32 = arith.constant 0 : i32
    %c0_i32_0 = arith.constant 0 : i32
    %c0_i32_1 = arith.constant 0 : i32
    return %c0_i32, %c0_i32_0 : i32, i32
  }
  func.func @transform_4(%arg0: i32) -> (i32, i32) {
    %c0_i32 = arith.constant 0 : i32
    %c0_i32_0 = arith.constant 0 : i32
    %c0_i32_1 = arith.constant 0 : i32
    return %c0_i32, %c0_i32_0 : i32, i32
  }
  func.func @transform_5(%arg0: i32) -> (i32, i32) {
    %c0_i32 = arith.constant 0 : i32
    %c0_i32_0 = arith.constant 0 : i32
    %c0_i32_1 = arith.constant 0 : i32
    return %c0_i32, %c0_i32_0 : i32, i32
  }
  func.func @transform_6(%arg0: i32) -> (i32, i32) {
    %c0_i32 = arith.constant 0 : i32
    %c0_i32_0 = arith.constant 0 : i32
    return %arg0, %c0_i32 : i32, i32
  }
}

</mosaic_0001>

<llo_original>
// kernel: tpu_custom_call.1
$region0: #{tpu_custom_call.1}
  #allocation0 [shape = 'u32[]', space=smem, size = 0x4, offset = 0x4, fixed_abs, tag = 'smem constant byte address 0x4 - core index']
  #allocation1 [shape = 'u32[72,128]{1,0:T(1,128)}', space=vmem, size = 0x9000, scoped, tag = 'internal scratch']
  %s0 = inlined_call_operand.vmem [shape: f32[64,32], index: 0, kind: input, shape index: {}]
  %s1 = inlined_call_operand.vmem [shape: f32[32,64], index: 1, kind: input, shape index: {}]
  %s2 = inlined_call_operand.vmem [shape: f32[8,64], index: 2, kind: input, shape index: {}]
  %s3 = inlined_call_operand.vmem [shape: f32[8,64], index: 3, kind: input, shape index: {}]
  %s4 = inlined_call_operand.vmem [shape: f32[1,64], index: 4, kind: input, shape index: {}]
  %s5 = inlined_call_operand.vmem [shape: f32[64,32], index: 5, kind: input, shape index: {}]
  %s6 = inlined_call_operand.vmem [shape: f32[64,32], index: 6, kind: output, shape index: {}]
  %s7 = sld [smem:[#allocation0]]
  $region57: #{tpu_custom_call.1} parent=0
    _
  %s9 = ssub.s32 1, %s7
  %s10 = scalar_select 0, %s9, %s7
  loop: start=0, step=1, limit=4
  $region2: #{tpu_custom_call.1} parent=0 // loop_pre_header
    _
  $region3: #{tpu_custom_call.1} parent=0 // loop_header
    %s12 = sphi 0, %s16
    %p13 = scmp.ge.s32.totalorder %s12, 4
    %s22 = sphi 0, %s24
    %s25 = sphi 0, %s22
    %s26 = sphi 0, %s25
    %s42 = sphi 0, %s26
    %s46 = sphi 0, %s46
    %s48 = sphi 0, %s46
    %s49 = sphi 0, %s48
    %s63 = sphi 0, %s49
    %s67 = sphi 0, %s67
    %s69 = sphi 0, %s67
    %s70 = sphi 0, %s69
    %s84 = sphi 0, %s70
    %s88 = sphi 0, %s88
    %s90 = sphi 0, %s88
    %s91 = sphi 0, %s90
    %s105 = sphi 0, %s91
    %s109 = sphi 0, %s109
    %s111 = sphi 0, %s109
    %s112 = sphi 0, %s111
    %s126 = sphi 0, %s112
    %s130 = sphi 0, %s130
    %s132 = sphi 0, %s130
    %s133 = sphi 0, %s132
    %s147 = sphi 0, %s133
    %s153 = sphi 0, %s155
    %s156 = sphi 0, %s153
    %s157 = sphi 0, %s156
    %s173 = sphi 0, %s157
  $region4: #{tpu_custom_call.1} parent=0 // loop_header_branch
    %15 = sbr.rel (%p13) target = $region8
  $region5: #{tpu_custom_call.1} parent=0 // loop_body
    %s17 = ssub.s32 %s12, 1
    %s18 = ssub.s32 %s12, 2
    %s19 = sadd.s32 %s12, 1
    %s20 = ssub.s32 %s12, %s19
    %p21 = scmp.eq.s32.totalorder %s20, 0
    %s23 = sadd.s32 %s22, 1
    %s24 = scalar_select %p21, %s22, %s23
    %p27 = pneg %p21
    %p28 = scmp.eq.s32.totalorder %s12, 1
    %p29 = por %p27, %p28
    %p30 = scmp.ne.s32.totalorder %s22, %s25
    %p31 = scmp.eq.s32.totalorder %s12, 0
    %p32 = por %p30, %p31
    %p33 = scmp.ne.s32.totalorder %s22, %s25
    %p34 = scmp.eq.s32.totalorder %s17, 1
    %p35 = por %p33, %p34
    %p36 = scmp.ne.s32.totalorder %s25, %s26
    %p37 = scmp.eq.s32.totalorder %s17, 0
    %p38 = por %p36, %p37
    %p39 = scmp.ne.s32.totalorder %s25, %s26
    %p40 = scmp.eq.s32.totalorder %s18, 1
    %p41 = por %p39, %p40
    %p43 = scmp.ne.s32.totalorder %s26, %s42
    %p44 = scmp.eq.s32.totalorder %s18, 0
    %p45 = por %p43, %p44
    %s47 = sadd.s32 %s46, 1
    %p50 = scmp.eq.s32.totalorder %s12, 1
    %p51 = scmp.ne.s32.totalorder %s46, %s48
    %p52 = scmp.eq.s32.totalorder %s12, 0
    %p53 = por %p51, %p52
    %p54 = scmp.ne.s32.totalorder %s46, %s48
    %p55 = scmp.eq.s32.totalorder %s17, 1
    %p56 = por %p54, %p55
    %p57 = scmp.ne.s32.totalorder %s48, %s49
    %p58 = scmp.eq.s32.totalorder %s17, 0
    %p59 = por %p57, %p58
    %p60 = scmp.ne.s32.totalorder %s48, %s49
    %p61 = scmp.eq.s32.totalorder %s18, 1
    %p62 = por %p60, %p61
    %p64 = scmp.ne.s32.totalorder %s49, %s63
    %p65 = scmp.eq.s32.totalorder %s18, 0
    %p66 = por %p64, %p65
    %s68 = sadd.s32 %s67, 1
    %p71 = scmp.eq.s32.totalorder %s12, 1
    %p72 = scmp.ne.s32.totalorder %s67, %s69
    %p73 = scmp.eq.s32.totalorder %s12, 0
    %p74 = por %p72, %p73
    %p75 = scmp.ne.s32.totalorder %s67, %s69
    %p76 = scmp.eq.s32.totalorder %s17, 1
    %p77 = por %p75, %p76
    %p78 = scmp.ne.s32.totalorder %s69, %s70
    %p79 = scmp.eq.s32.totalorder %s17, 0
    %p80 = por %p78, %p79
    %p81 = scmp.ne.s32.totalorder %s69, %s70
    %p82 = scmp.eq.s32.totalorder %s18, 1
    %p83 = por %p81, %p82
    %p85 = scmp.ne.s32.totalorder %s70, %s84
    %p86 = scmp.eq.s32.totalorder %s18, 0
    %p87 = por %p85, %p86
    %s89 = sadd.s32 %s88, 1
    %p92 = scmp.eq.s32.totalorder %s12, 1
    %p93 = scmp.ne.s32.totalorder %s88, %s90
    %p94 = scmp.eq.s32.totalorder %s12, 0
    %p95 = por %p93, %p94
    %p96 = scmp.ne.s32.totalorder %s88, %s90
    %p97 = scmp.eq.s32.totalorder %s17, 1
    %p98 = por %p96, %p97
    %p99 = scmp.ne.s32.totalorder %s90, %s91
    %p100 = scmp.eq.s32.totalorder %s17, 0
    %p101 = por %p99, %p100
    %p102 = scmp.ne.s32.totalorder %s90, %s91
    %p103 = scmp.eq.s32.totalorder %s18, 1
    %p104 = por %p102, %p103
    %p106 = scmp.ne.s32.totalorder %s91, %s105
    %p107 = scmp.eq.s32.totalorder %s18, 0
    %p108 = por %p106, %p107
    %s110 = sadd.s32 %s109, 1
    %p113 = scmp.eq.s32.totalorder %s12, 1
    %p114 = scmp.ne.s32.totalorder %s109, %s111
    %p115 = scmp.eq.s32.totalorder %s12, 0
    %p116 = por %p114, %p115
    %p117 = scmp.ne.s32.totalorder %s109, %s111
    %p118 = scmp.eq.s32.totalorder %s17, 1
    %p119 = por %p117, %p118
    %p120 = scmp.ne.s32.totalorder %s111, %s112
    %p121 = scmp.eq.s32.totalorder %s17, 0
    %p122 = por %p120, %p121
    %p123 = scmp.ne.s32.totalorder %s111, %s112
    %p124 = scmp.eq.s32.totalorder %s18, 1
    %p125 = por %p123, %p124
    %p127 = scmp.ne.s32.totalorder %s112, %s126
    %p128 = scmp.eq.s32.totalorder %s18, 0
    %p129 = por %p127, %p128
    %s131 = sadd.s32 %s130, 1
    %p134 = scmp.eq.s32.totalorder %s12, 1
    %p135 = scmp.ne.s32.totalorder %s130, %s132
    %p136 = scmp.eq.s32.totalorder %s12, 0
    %p137 = por %p135, %p136
    %p138 = scmp.ne.s32.totalorder %s130, %s132
    %p139 = scmp.eq.s32.totalorder %s17, 1
    %p140 = por %p138, %p139
    %p141 = scmp.ne.s32.totalorder %s132, %s133
    %p142 = scmp.eq.s32.totalorder %s17, 0
    %p143 = por %p141, %p142
    %p144 = scmp.ne.s32.totalorder %s132, %s133
    %p145 = scmp.eq.s32.totalorder %s18, 1
    %p146 = por %p144, %p145
    %p148 = scmp.ne.s32.totalorder %s133, %s147
    %p149 = scmp.eq.s32.totalorder %s18, 0
    %p150 = por %p148, %p149
    %s151 = ssub.s32 %s12, %s19
    %p152 = scmp.eq.s32.totalorder %s151, 0
    %s154 = sadd.s32 %s153, 1
    %s155 = scalar_select %p152, %s153, %s154
    %p158 = pneg %p152
    %p159 = scmp.eq.s32.totalorder %s12, 1
    %p160 = por %p158, %p159
    %p161 = scmp.ne.s32.totalorder %s153, %s156
    %p162 = scmp.eq.s32.totalorder %s12, 0
    %p163 = por %p161, %p162
    %p164 = scmp.ne.s32.totalorder %s153, %s156
    %p165 = scmp.eq.s32.totalorder %s17, 1
    %p166 = por %p164, %p165
    %p167 = scmp.ne.s32.totalorder %s156, %s157
    %p168 = scmp.eq.s32.totalorder %s17, 0
    %p169 = por %p167, %p168
    %p170 = scmp.ne.s32.totalorder %s156, %s157
    %p171 = scmp.eq.s32.totalorder %s18, 1
    %p172 = por %p170, %p171
    %p174 = scmp.ne.s32.totalorder %s157, %s173
    %p175 = scmp.eq.s32.totalorder %s18, 0
    %p176 = por %p174, %p175
    %p177 = scmp.le.s32.totalorder 1, %s12
    %p178 = scmp.lt.s32.totalorder %s12, 3
    %p179 = pnand %p177, %p178
    %p180 = pneg %p179
    // Predicated region
    $region9: #{tpu_custom_call.1} parent=5 // pred_check
      _
    $region10: #{tpu_custom_call.1} parent=5 // pred_check_branch
      %182 = sbr.rel (%p179) target = $region12
    $region11: #{tpu_custom_call.1} parent=5 // pred_region
      %s183 = ssub.s32 %s12, 1
      // Predicated region
      $region13: #{tpu_custom_call.1} parent=11 // pred_check
        %p184 = pneg %p59
      $region14: #{tpu_custom_call.1} parent=11 // pred_check_branch
        %186 = sbr.rel (%p184) target = $region16
      $region15: #{tpu_custom_call.1} parent=11 // pred_region
        _
      $region16: #{tpu_custom_call.1} parent=11 // pred_fallthru
        _
      // Predicated region
      $region17: #{tpu_custom_call.1} parent=11 // pred_check
        %p187 = pneg %p80
      $region18: #{tpu_custom_call.1} parent=11 // pred_check_branch
        %189 = sbr.rel (%p187) target = $region20
      $region19: #{tpu_custom_call.1} parent=11 // pred_region
        _
      $region20: #{tpu_custom_call.1} parent=11 // pred_fallthru
        _
      // Predicated region
      $region21: #{tpu_custom_call.1} parent=11 // pred_check
        %p190 = pneg %p101
      $region22: #{tpu_custom_call.1} parent=11 // pred_check_branch
        %192 = sbr.rel (%p190) target = $region24
      $region23: #{tpu_custom_call.1} parent=11 // pred_region
        _
      $region24: #{tpu_custom_call.1} parent=11 // pred_fallthru
        _
      // Predicated region
      $region25: #{tpu_custom_call.1} parent=11 // pred_check
        %p193 = pneg %p122
      $region26: #{tpu_custom_call.1} parent=11 // pred_check_branch
        %195 = sbr.rel (%p193) target = $region28
      $region27: #{tpu_custom_call.1} parent=11 // pred_region
        _
      $region28: #{tpu_custom_call.1} parent=11 // pred_fallthru
        _
      // Predicated region
      $region29: #{tpu_custom_call.1} parent=11 // pred_check
        %p196 = pneg %p143
      $region30: #{tpu_custom_call.1} parent=11 // pred_check_branch
        %198 = sbr.rel (%p196) target = $region32
      $region31: #{tpu_custom_call.1} parent=11 // pred_region
        _
      $region32: #{tpu_custom_call.1} parent=11 // pred_fallthru
        _
    $region12: #{tpu_custom_call.1} parent=5 // pred_fallthru
      _
    %p199 = scmp.lt.s32.totalorder %s12, 2
    // Predicated region
    $region33: #{tpu_custom_call.1} parent=5 // pred_check
      %p200 = pneg %p199
    $region34: #{tpu_custom_call.1} parent=5 // pred_check_branch
      %202 = sbr.rel (%p200) target = $region36
    $region35: #{tpu_custom_call.1} parent=5 // pred_region
      // Predicated region
      $region37: #{tpu_custom_call.1} parent=35 // pred_check
        %p203 = pneg %p32
      $region38: #{tpu_custom_call.1} parent=35 // pred_check_branch
        %205 = sbr.rel (%p203) target = $region40
      $region39: #{tpu_custom_call.1} parent=35 // pred_region
        %s206 = smul.u32 4, %s12
        %p207 = scmp.lt.s32.totalorder %s206, 7
        %s208 = scalar_select %p207, %s206, 7
        %s209 = smul.addr %s208, 8
        %s210 = scalar_lea.vmem %s0, %s209
        %s211 = smul.u32 4, %s12
      $region40: #{tpu_custom_call.1} parent=35 // pred_fallthru
        _
    $region36: #{tpu_custom_call.1} parent=5 // pred_fallthru
      _
    %p212 = scmp.le.s32.totalorder 1, %s12
    %p213 = scmp.lt.s32.totalorder %s12, 3
    %p214 = pnand %p212, %p213
    %p215 = pneg %p214
    // Predicated region
    $region41: #{tpu_custom_call.1} parent=5 // pred_check
      _
    $region42: #{tpu_custom_call.1} parent=5 // pred_check_branch
      %217 = sbr.rel (%p214) target = $region44
    $region43: #{tpu_custom_call.1} parent=5 // pred_region
      %s218 = ssub.s32 %s12, 1
      %s219 = smul.u32 4, %s17
      %p220 = scmp.lt.s32.totalorder %s219, 7
      %s221 = scalar_select %p220, %s219, 7
      %s222 = smul.addr %s221, 8
      %s223 = scalar_lea.vmem %s0, %s222
      %p224 = pneg %p38
      %p225 = pneg %p35
      %p226 = pneg %p59
      %p227 = pneg %p56
      %p228 = pneg %p80
      %p229 = pneg %p77
      %p230 = pneg %p101
      %p231 = pneg %p98
      %p232 = pneg %p122
      %p233 = pneg %p119
      %p234 = pneg %p143
      %p235 = pneg %p140
      %p236 = pneg %p169
      %p237 = pneg %p166
      %s238 = smul.u32 4, %s17
      %p239 = scmp.lt.s32.totalorder %s238, 7
      %s240 = scalar_select %p239, %s238, 7
      %s241 = smul.addr %s240, 8
      %s242 = scalar_lea.vmem %s6, %s241
      %s243 = smul.u32 4, %s17
      %p244 = scmp.lt.s32.totalorder %s243, 7
      %s245 = scalar_select %p244, %s243, 7
      %s246 = smul.addr %s245, 8
      %s247 = scalar_lea.vmem %s0, %s246
      %s248 = smul.u32 4, %s17
      %s249 = smul.u32 4, %s17
      %p250 = scmp.lt.s32.totalorder %s249, 7
      %s251 = scalar_select %p250, %s249, 7
      %s252 = smul.addr %s251, 8
      %s253 = scalar_lea.vmem %s6, %s252
      %s254 = smul.u32 4, %s17
      %v255 = vld [vmem:[%s247] sm:$0xff]
      %v256 = vld [vmem:[%s247 + $0x8] sm:$0xff]
      %v257 = vld [vmem:[%s247 + $0x10] sm:$0xff]
      %v258 = vld [vmem:[%s247 + $0x18] sm:$0xff]
      %v259 = vlaneseq
      %v260 = vshrl.u32 %v259, 7
      %v261 = vadd.s32 %v260, 8
      %v262 = vadd.s32 %v260, 16
      %v263 = vadd.s32 %v260, 24
      %vm264 = vcmp.lt.s32.totalorder %v260, 0
      %v265 = vsub.s32 0, %v260
      %v266 = vsel %vm264, %v265, %v260
      %v267 = vshrl.u32 %v266, 4
      %v268 = vand.u32 %v266, 15
      %v269 = vsub.s32 0, %v268
      %v270 = vsel %vm264, %v269, %v268
      %vm271 = vcmp.lt.s32.totalorder %v261, 0
      %v272 = vsub.s32 0, %v261
      %v273 = vsel %vm271, %v272, %v261
      %v274 = vshrl.u32 %v273, 4
      %v275 = vand.u32 %v273, 15
      %v276 = vsub.s32 0, %v275
      %v277 = vsel %vm271, %v276, %v275
      %vm278 = vcmp.lt.s32.totalorder %v262, 0
      %v279 = vsub.s32 0, %v262
      %v280 = vsel %vm278, %v279, %v262
      %v281 = vshrl.u32 %v280, 4
      %v282 = vand.u32 %v280, 15
      %v283 = vsub.s32 0, %v282
      %v284 = vsel %vm278, %v283, %v282
      %vm285 = vcmp.lt.s32.totalorder %v263, 0
      %v286 = vsub.s32 0, %v263
      %v287 = vsel %vm285, %v286, %v263
      %v288 = vshrl.u32 %v287, 4
      %v289 = vand.u32 %v287, 15
      %v290 = vsub.s32 0, %v289
      %v291 = vsel %vm285, %v290, %v289
      %vm292 = vcmp.ne.s32.totalorder %v270, 0
      %vm293 = vcmp.ne.s32.totalorder %v277, 0
      %vm294 = vcmp.ne.s32.totalorder %v284, 0
      %vm295 = vcmp.ne.s32.totalorder %v291, 0
      %vm296 = vcmp.lt.s32.totalorder %v270, 0
      %vm297 = vcmp.lt.s32.totalorder %v277, 0
      %vm298 = vcmp.lt.s32.totalorder %v284, 0
      %vm299 = vcmp.lt.s32.totalorder %v291, 0
      %vm300 = vmand %vm296, %vm292
      %vm301 = vmand %vm297, %vm293
      %vm302 = vmand %vm298, %vm294
      %vm303 = vmand %vm299, %vm295
      %v304 = vadd.s32 %v270, 16
      %v305 = vadd.s32 %v277, 16
      %v306 = vadd.s32 %v284, 16
      %v307 = vadd.s32 %v291, 16
      %v308 = vsel %vm300, %v304, %v270
      %v309 = vsel %vm301, %v305, %v277
      %v310 = vsel %vm302, %v306, %v284
      %v311 = vsel %vm303, %v307, %v291
      %vm312 = vcmp.eq.s32.totalorder %v308, 0
      %vm313 = vcmp.eq.s32.totalorder %v309, 0
      %vm314 = vcmp.eq.s32.totalorder %v310, 0
      %vm315 = vcmp.eq.s32.totalorder %v311, 0
      %v316 = vrot.slane %v255, 7
      %v317 = vrot.slane %v256, 7
      %v318 = vrot.slane %v257, 7
      %v319 = vrot.slane %v258, 7
      %vm320 = vcmp.lt.s32.totalorder %v260, 1
      %v321 = vsel %vm320, %v318, %v319
      %v322 = vsel %vm320, %v317, %v318
      %v323 = vsel %vm320, %v316, %v317
      %v324 = vsel %vm320, %v319, %v316
      %v325 = vsel %vm312, 1, 0
      %v326 = vsel %vm313, 1, 0
      %v327 = vsel %vm314, 1, 0
      %v328 = vsel %vm315, 1, 0
      %vm329 = vcmp.eq.s32.totalorder %v325, 1
      %vm330 = vcmp.eq.s32.totalorder %v326, 1
      %vm331 = vcmp.eq.s32.totalorder %v327, 1
      %vm332 = vcmp.eq.s32.totalorder %v328, 1
      %v333 = vsel %vm329, 0.0, %v324
      %v334 = vsel %vm330, 0.0, %v323
      %v335 = vsel %vm331, 0.0, %v322
      %v336 = vsel %vm332, 0.0, %v321
      %vm337 = vcmp.eq.s32.totalorder %v308, 15
      %vm338 = vcmp.eq.s32.totalorder %v309, 15
      %vm339 = vcmp.eq.s32.totalorder %v310, 15
      %vm340 = vcmp.eq.s32.totalorder %v311, 15
      %v341 = vrot.slane %v255, 1
      %v342 = vrot.slane %v256, 1
      %v343 = vrot.slane %v257, 1
      %v344 = vrot.slane %v258, 1
      %vm345 = vcmp.lt.s32.totalorder %v260, 7
      %v346 = vsel %vm345, %v343, %v344
      %v347 = vsel %vm345, %v342, %v343
      %v348 = vsel %vm345, %v341, %v342
      %v349 = vsel %vm345, %v344, %v341
      %v350 = vsel %vm337, 1, 0
      %v351 = vsel %vm338, 1, 0
      %v352 = vsel %vm339, 1, 0
      %v353 = vsel %vm340, 1, 0
      %vm354 = vcmp.eq.s32.totalorder %v350, 1
      %vm355 = vcmp.eq.s32.totalorder %v351, 1
      %vm356 = vcmp.eq.s32.totalorder %v352, 1
      %vm357 = vcmp.eq.s32.totalorder %v353, 1
      %v358 = vsel %vm354, 0.0, %v348
      %v359 = vsel %vm355, 0.0, %v347
      %v360 = vsel %vm356, 0.0, %v346
      %v361 = vsel %vm357, 0.0, %v349
      %v362 = vld [vmem:[%s1] sm:$0xff]
      %v363 = vld [vmem:[%s1 + $0x8] sm:$0xff]
      %v364 = vld [vmem:[%s1 + $0x10] sm:$0xff]
      %v365 = vld [vmem:[%s1 + $0x18] sm:$0xff]
      %v366 = vld [vmem:[%s2] sm:$0xff]
      %vm367 = vcmask 64512
      %v369 = vsel %vm367, %v333, 0
      %v372 = vsel %vm367, %v334, 0
      %v375 = vsel %vm367, %v335, 0
      %v378 = vsel %vm367, %v336, 0
      %380 = vmatpush.msra.mxu0 0.0
      %381 = vmatpush.msra.mxu0 0.0
      %382 = vmatpush.msra.mxu0 0.0
      %383 = vmatpush.msra.mxu0 0.0
      %384 = vmatpush.msra.mxu0 0.0
      %385 = vmatpush.msra.mxu0 0.0
      %386 = vmatpush.msra.mxu0 0.0
      %387 = vmatpush.msra.mxu0 0.0
      %388 = vmatpush.msra.mxu0 0.0
      %389 = vmatpush.msra.mxu0 0.0
      %390 = vmatpush.msra.mxu0 0.0
      %391 = vmatpush.msra.mxu0 0.0
      %392 = vmatpush.msra.mxu0 0.0
      %393 = vmatpush.msra.mxu0 0.0
      %394 = vmatpush.msra.mxu0 0.0
      %395 = vmatpush.msra.mxu0 %v366
      %396 = vmatmul.f32.gmra.mxu0 %v369
      %v397 = vpop.f32.mrf.mxu0
      %v398 = vadd.f32 0.0, %v397
      %399 = vmatmul.f32.gmra.mxu0 %v372
      %v400 = vpop.f32.mrf.mxu0
      %v401 = vadd.f32 0.0, %v400
      %402 = vmatmul.f32.gmra.mxu0 %v375
      %v403 = vpop.f32.mrf.mxu0
      %v404 = vadd.f32 0.0, %v403
      %405 = vmatmul.f32.gmra.mxu0 %v378
      %v406 = vpop.f32.mrf.mxu0
      %v407 = vadd.f32 0.0, %v406
      %408 = vdwg.mxu0
      %vm409 = vcmask 261120
      %v411 = vsel %vm409, %v255, 0
      %v414 = vsel %vm409, %v256, 0
      %v417 = vsel %vm409, %v257, 0
      %v420 = vsel %vm409, %v258, 0
      %422 = vmatpush.msra.mxu0 0.0
      %423 = vmatpush.msra.mxu0 0.0
      %424 = vmatpush.msra.mxu0 0.0
      %425 = vmatpush.msra.mxu0 0.0
      %426 = vmatpush.msra.mxu0 0.0
      %427 = vmatpush.msra.mxu0 0.0
      %428 = vmatpush.msra.mxu0 0.0
      %429 = vmatpush.msra.mxu0 0.0
      %430 = vmatpush.msra.mxu0 0.0
      %431 = vmatpush.msra.mxu0 0.0
      %432 = vmatpush.msra.mxu0 0.0
      %433 = vmatpush.msra.mxu0 0.0
      %434 = vmatpush.msra.mxu0 %v365
      %435 = vmatpush.msra.mxu0 %v364
      %436 = vmatpush.msra.mxu0 %v363
      %437 = vmatpush.msra.mxu0 %v362
      %438 = vmatmul.f32.gmra.mxu0 %v411
      %v439 = vpop.f32.mrf.mxu0
      %v440 = vadd.f32 %v398, %v439
      %441 = vmatmul.f32.gmra.mxu0 %v414
      %v442 = vpop.f32.mrf.mxu0
      %v443 = vadd.f32 %v401, %v442
      %444 = vmatmul.f32.gmra.mxu0 %v417
      %v445 = vpop.f32.mrf.mxu0
      %v446 = vadd.f32 %v404, %v445
      %447 = vmatmul.f32.gmra.mxu0 %v420
      %v448 = vpop.f32.mrf.mxu0
      %v449 = vadd.f32 %v407, %v448
      %450 = vdwg.mxu0
      %v451 = vld [vmem:[%s3] sm:$0xff]
      %v453 = vsel %vm367, %v358, 0
      %v456 = vsel %vm367, %v359, 0
      %v459 = vsel %vm367, %v360, 0
      %v462 = vsel %vm367, %v361, 0
      %464 = vmatpush.msra.mxu0 0.0
      %465 = vmatpush.msra.mxu0 0.0
      %466 = vmatpush.msra.mxu0 0.0
      %467 = vmatpush.msra.mxu0 0.0
      %468 = vmatpush.msra.mxu0 0.0
      %469 = vmatpush.msra.mxu0 0.0
      %470 = vmatpush.msra.mxu0 0.0
      %471 = vmatpush.msra.mxu0 0.0
      %472 = vmatpush.msra.mxu0 0.0
      %473 = vmatpush.msra.mxu0 0.0
      %474 = vmatpush.msra.mxu0 0.0
      %475 = vmatpush.msra.mxu0 0.0
      %476 = vmatpush.msra.mxu0 0.0
      %477 = vmatpush.msra.mxu0 0.0
      %478 = vmatpush.msra.mxu0 0.0
      %479 = vmatpush.msra.mxu0 %v451
      %480 = vmatmul.f32.gmra.mxu0 %v453
      %v481 = vpop.f32.mrf.mxu0
      %v482 = vadd.f32 0.0, %v481
      %483 = vmatmul.f32.gmra.mxu0 %v456
      %v484 = vpop.f32.mrf.mxu0
      %v485 = vadd.f32 0.0, %v484
      %486 = vmatmul.f32.gmra.mxu0 %v459
      %v487 = vpop.f32.mrf.mxu0
      %v488 = vadd.f32 0.0, %v487
      %489 = vmatmul.f32.gmra.mxu0 %v462
      %v490 = vpop.f32.mrf.mxu0
      %v491 = vadd.f32 0.0, %v490
      %492 = vdwg.mxu0
      %v493 = vadd.f32 %v440, %v482
      %v494 = vadd.f32 %v443, %v485
      %v495 = vadd.f32 %v446, %v488
      %v496 = vadd.f32 %v449, %v491
      %v497 = vld [vmem:[%s4] sm:$0x1]
      %v499 = vperm.slane %v497, 0
      %v501 = vadd.f32 %v493, %v499
      %v502 = vadd.f32 %v494, %v499
      %v503 = vadd.f32 %v495, %v499
      %v504 = vadd.f32 %v496, %v499
      %v505 = vmax.f32 %v501, 0.0
      %v506 = vmax.f32 %v502, 0.0
      %v507 = vmax.f32 %v503, 0.0
      %v508 = vmax.f32 %v504, 0.0
      %v509 = vld [vmem:[%s5] sm:$0xff]
      %v510 = vld [vmem:[%s5 + $0x8] sm:$0xff]
      %v511 = vld [vmem:[%s5 + $0x10] sm:$0xff]
      %v512 = vld [vmem:[%s5 + $0x18] sm:$0xff]
      %v513 = vld [vmem:[%s5 + $0x20] sm:$0xff]
      %v514 = vld [vmem:[%s5 + $0x28] sm:$0xff]
      %v515 = vld [vmem:[%s5 + $0x30] sm:$0xff]
      %v516 = vld [vmem:[%s5 + $0x38] sm:$0xff]
      %vm517 = vcmask 523264
      %v519 = vsel %vm517, %v505, 0
      %v522 = vsel %vm517, %v506, 0
      %v525 = vsel %vm517, %v507, 0
      %v528 = vsel %vm517, %v508, 0
      %530 = vmatpush.msra.mxu0 0.0
      %531 = vmatpush.msra.mxu0 0.0
      %532 = vmatpush.msra.mxu0 0.0
      %533 = vmatpush.msra.mxu0 0.0
      %534 = vmatpush.msra.mxu0 0.0
      %535 = vmatpush.msra.mxu0 0.0
      %536 = vmatpush.msra.mxu0 0.0
      %537 = vmatpush.msra.mxu0 0.0
      %538 = vmatpush.msra.mxu0 %v516
      %539 = vmatpush.msra.mxu0 %v515
      %540 = vmatpush.msra.mxu0 %v514
      %541 = vmatpush.msra.mxu0 %v513
      %542 = vmatpush.msra.mxu0 %v512
      %543 = vmatpush.msra.mxu0 %v511
      %544 = vmatpush.msra.mxu0 %v510
      %545 = vmatpush.msra.mxu0 %v509
      %546 = vmatmul.f32.gmra.mxu0 %v519
      %v547 = vpop.f32.mrf.mxu0
      %v548 = vadd.f32 %v255, %v547
      %549 = vmatmul.f32.gmra.mxu0 %v522
      %v550 = vpop.f32.mrf.mxu0
      %v551 = vadd.f32 %v256, %v550
      %552 = vmatmul.f32.gmra.mxu0 %v525
      %v553 = vpop.f32.mrf.mxu0
      %v554 = vadd.f32 %v257, %v553
      %555 = vmatmul.f32.gmra.mxu0 %v528
      %v556 = vpop.f32.mrf.mxu0
      %v557 = vadd.f32 %v258, %v556
      %558 = vdwg.mxu0
      %559 = vst.msk [vmem:[%s253] sm:$0xff] %vm409, %v548
      %560 = vst.msk [vmem:[%s253 + $0x8] sm:$0xff] %vm409, %v551
      %561 = vst.msk [vmem:[%s253 + $0x10] sm:$0xff] %vm409, %v554
      %562 = vst.msk [vmem:[%s253 + $0x18] sm:$0xff] %vm409, %v557
      %s563 = smul.u32 4, %s17
      %p564 = scmp.lt.s32.totalorder %s563, 7
      %s565 = scalar_select %p564, %s563, 7
      %s566 = smul.addr %s565, 8
      %s567 = scalar_lea.vmem %s6, %s566
      // Predicated region
      $region45: #{tpu_custom_call.1} parent=43 // pred_check
        %p568 = pneg %p166
      $region46: #{tpu_custom_call.1} parent=43 // pred_check_branch
        %570 = sbr.rel (%p568) target = $region48
      $region47: #{tpu_custom_call.1} parent=43 // pred_region
        %s571 = smul.u32 4, %s17
      $region48: #{tpu_custom_call.1} parent=43 // pred_fallthru
        _
    $region44: #{tpu_custom_call.1} parent=5 // pred_fallthru
      _
    %p572 = scmp.le.s32.totalorder 2, %s12
    // Predicated region
    $region49: #{tpu_custom_call.1} parent=5 // pred_check
      %p573 = pneg %p572
    $region50: #{tpu_custom_call.1} parent=5 // pred_check_branch
      %575 = sbr.rel (%p573) target = $region52
    $region51: #{tpu_custom_call.1} parent=5 // pred_region
      %s576 = ssub.s32 %s12, 2
      // Predicated region
      $region53: #{tpu_custom_call.1} parent=51 // pred_check
        %p577 = pneg %p172
      $region54: #{tpu_custom_call.1} parent=51 // pred_check_branch
        %579 = sbr.rel (%p577) target = $region56
      $region55: #{tpu_custom_call.1} parent=51 // pred_region
        %s580 = smul.u32 4, %s18
        %p581 = scmp.lt.s32.totalorder %s580, 7
        %s582 = scalar_select %p581, %s580, 7
        %s583 = smul.addr %s582, 8
        %s584 = scalar_lea.vmem %s6, %s583
      $region56: #{tpu_custom_call.1} parent=51 // pred_fallthru
        _
    $region52: #{tpu_custom_call.1} parent=5 // pred_fallthru
      _
  $region6: #{tpu_custom_call.1} parent=0 // loop_footer
    %s16 = sadd.s32 1, %s12
  $region7: #{tpu_custom_call.1} parent=0 // loop_footer_branch
    %11 = sbr.rel target = $region3
  $region8: #{tpu_custom_call.1} parent=0 // loop_exit
    _

</llo_original>
